<compile_context>
chip_gen: v6e
topology: v6e:2x2x1
jax: 0.10.0
libtpu: 0.0.40
codegen_flags: <defaults>
</compile_context>

<pallas_src>
import functools

import jax
import jax.numpy as jnp
from jax.experimental import pallas as pl
from jax.experimental.pallas import tpu as pltpu


def _round_up(a, b):
    return ((a + b - 1) // b) * b


# ---------------------------------------------------------------------------
# Kernel 1: fused InstanceNorm3d (no affine) + LeakyReLU on a (rows, S) slab.
# ---------------------------------------------------------------------------
def _in_lrelu_kernel(x_ref, o_ref, *, eps, negative_slope):
    x = x_ref[...].astype(jnp.float32)                       # (rows_tile, S)
    mean = jnp.mean(x, axis=-1, keepdims=True)
    xc = x - mean
    var = jnp.mean(xc * xc, axis=-1, keepdims=True)          # biased variance
    y = xc * jax.lax.rsqrt(var + eps)                        # rsqrt -> EUP slot
    y = jnp.where(y >= 0, y, negative_slope * y)             # LeakyReLU(0.01)
    o_ref[...] = y.astype(o_ref.dtype)


def instance_norm_leaky_relu(x, *, eps=1e-5, negative_slope=0.01,
                             target_block_bytes=2 * 1024 * 1024):
    """InstanceNorm3d(affine=False) + LeakyReLU, NCDHW layout, no transposes."""
    N, C, D, H, W = x.shape
    S = D * H * W
    R = N * C
    x2 = x.reshape(R, S)                                     # free reshape

    itemsize = jnp.dtype(x.dtype).itemsize
    sub = 16 if itemsize == 2 else 8                         # bf16: 2 rows / sublane
    row_bytes = S * itemsize
    max_rows = max(sub, (target_block_bytes // max(row_bytes, 1)) // sub * sub)
    rows_tile = int(min(max_rows, _round_up(R, sub)))
    Rp = _round_up(R, rows_tile)
    if Rp != R:                                              # padded rows -> y == 0
        x2 = jnp.pad(x2, ((0, Rp - R), (0, 0)))

    out = pl.pallas_call(
        functools.partial(_in_lrelu_kernel, eps=eps,
                          negative_slope=negative_slope),
        out_shape=jax.ShapeDtypeStruct((Rp, S), x.dtype),
        grid=(Rp // rows_tile,),
        in_specs=[pl.BlockSpec((rows_tile, S), lambda i: (i, 0))],
        out_specs=pl.BlockSpec((rows_tile, S), lambda i: (i, 0)),
        compiler_params=pltpu.CompilerParams(
            dimension_semantics=("parallel",),
            vmem_limit_bytes=32 * 1024 * 1024,
        ),
    )(x2)
    return out[:R].reshape(N, C, D, H, W)


# ---------------------------------------------------------------------------
# Kernel 2: Conv3d as an MXU matmul over im2col patches, + bias.
# ---------------------------------------------------------------------------
def _conv_matmul_kernel(w_ref, b_ref, p_ref, o_ref):
    # w_ref: (Co_p, Ci*K3)   b_ref: (Co_p, 1)
    # p_ref: (1, Ci*K3, s_tile)   o_ref: (1, Co_p, s_tile)
    acc = jnp.dot(w_ref[...], p_ref[0],
                  preferred_element_type=jnp.float32)
    o_ref[0] = (acc + b_ref[...]).astype(o_ref.dtype)


def conv3d(y, weight, bias, *, stride=(1, 1, 1), padding=(0, 0, 0)):
    N, Ci, D, H, W = y.shape
    Co, Ci2, Kd, Kh, Kw = weight.shape
    assert Ci2 == Ci
    sd, sh, sw = stride
    pd, ph, pw = padding

    yp = jnp.pad(y, ((0, 0), (0, 0), (pd, pd), (ph, ph), (pw, pw)))
    Dp, Hp, Wp = D + 2 * pd, H + 2 * ph, W + 2 * pw
    Do = (Dp - Kd) // sd + 1
    Ho = (Hp - Kh) // sh + 1
    Wo = (Wp - Kw) // sw + 1
    S_out = Do * Ho * Wo
    K3 = Kd * Kh * Kw
    Kdim = Ci * K3

    # TODO(synk): im2col patch extraction stays in plain JAX (strided 3-D
    # gather has no robust BlockSpec / in-kernel-reshape expression on TPU).
    pats = []
    for kd in range(Kd):
        for kh in range(Kh):
            for kw in range(Kw):
                sl = yp[:, :,
                        kd:kd + (Do - 1) * sd + 1:sd,
                        kh:kh + (Ho - 1) * sh + 1:sh,
                        kw:kw + (Wo - 1) * sw + 1:sw]        # (N, Ci, Do, Ho, Wo)
                pats.append(sl.reshape(N, Ci, S_out))
    patches = jnp.stack(pats, axis=2).reshape(N, Kdim, S_out)  # (ci, k) order

    w2 = weight.reshape(Co, Kdim)                            # matches (ci, k) order
    b2 = bias.reshape(Co, 1)
    Co_p = _round_up(Co, 8)
    if Co_p != Co:
        w2 = jnp.pad(w2, ((0, Co_p - Co), (0, 0)))
        b2 = jnp.pad(b2, ((0, Co_p - Co), (0, 0)))

    s_tile = int(min(2048, _round_up(S_out, 128)))           # lane-dense output
    S_pad = _round_up(S_out, s_tile)
    if S_pad != S_out:
        patches = jnp.pad(patches, ((0, 0), (0, 0), (0, S_pad - S_out)))

    out = pl.pallas_call(
        _conv_matmul_kernel,
        out_shape=jax.ShapeDtypeStruct((N, Co_p, S_pad), y.dtype),
        grid=(N, S_pad // s_tile),
        in_specs=[
            pl.BlockSpec((Co_p, Kdim), lambda n, s: (0, 0)),
            pl.BlockSpec((Co_p, 1), lambda n, s: (0, 0)),
            pl.BlockSpec((1, Kdim, s_tile), lambda n, s: (n, 0, s)),
        ],
        out_specs=pl.BlockSpec((1, Co_p, s_tile), lambda n, s: (n, 0, s)),
        compiler_params=pltpu.CompilerParams(
            dimension_semantics=("parallel", "parallel"),
            vmem_limit_bytes=32 * 1024 * 1024,
        ),
    )(w2, b2, patches)
    return out[:, :Co, :S_out].reshape(N, Co, Do, Ho, Wo)


# ---------------------------------------------------------------------------
# Module mirror.
# ---------------------------------------------------------------------------
class ConvBlock3d:
    """Pallas mirror of the PyTorch module: Conv3d(LeakyReLU(InstanceNorm3d(x)))."""

    def __init__(self, in_channels, out_channels, *, key,
                 kernel_size=3, stride=1, padding=0):
        def _triple(v):
            return (v, v, v) if isinstance(v, int) else tuple(v)

        self.kernel_size = _triple(kernel_size)
        self.stride = _triple(stride)
        self.padding = _triple(padding)
        kd, kh, kw = self.kernel_size
        fan_in = in_channels * kd * kh * kw
        bound = 1.0 / (fan_in ** 0.5)
        wkey, bkey = jax.random.split(key)
        self.weight = jax.random.uniform(
            wkey, (out_channels, in_channels, kd, kh, kw), jnp.float32,
            -bound, bound)
        self.bias = jax.random.uniform(
            bkey, (out_channels,), jnp.float32, -bound, bound)
        self.eps = 1e-5
        self.negative_slope = 0.01

    def __call__(self, x):
        y = instance_norm_leaky_relu(
            x, eps=self.eps, negative_slope=self.negative_slope)
        return conv3d(y, self.weight, self.bias,
                      stride=self.stride, padding=self.padding)


# ---------------------------------------------------------------------------
# Pure-JAX reference for validation.
# ---------------------------------------------------------------------------
def _reference_convblock3d(x, weight, bias, *, stride, padding,
                           eps=1e-5, negative_slope=0.01):
    xf = x.astype(jnp.float32)
    mean = jnp.mean(xf, axis=(2, 3, 4), keepdims=True)
    var = jnp.mean((xf - mean) ** 2, axis=(2, 3, 4), keepdims=True)
    y = (xf - mean) * jax.lax.rsqrt(var + eps)
    y = jnp.where(y >= 0, y, negative_slope * y)
    out = jax.lax.conv_general_dilated(
        y, weight.astype(jnp.float32),
        window_strides=stride,
        padding=[(p, p) for p in padding],
        dimension_numbers=("NCDHW", "OIDHW", "NCDHW"),
        precision=jax.lax.Precision.HIGHEST,
    )
    return (out + bias.reshape(1, -1, 1, 1, 1)).astype(x.dtype)


if __name__ == "__main__":
    key = jax.random.PRNGKey(0)
    kx, kp = jax.random.split(key)
    # Small NCDHW input: batch=2, in_channels=4, spatial=16^3; out_channels=8.
    x = jax.random.normal(kx, (2, 4, 16, 16, 16), dtype=jnp.float32)

    block = ConvBlock3d(4, 8, key=kp, kernel_size=3, stride=1, padding=1)
    out = jax.block_until_ready(block(x))

    ref = _reference_convblock3d(
        x, block.weight, block.bias,
        stride=block.stride, padding=block.padding,
        eps=block.eps, negative_slope=block.negative_slope)

    assert out.shape == (2, 8, 16, 16, 16), out.shape
    assert out.dtype == x.dtype
    assert jnp.allclose(out, ref, atol=1e-3, rtol=1e-3), \
        float(jnp.max(jnp.abs(out - ref)))

    print("KERNEL_OK")
</pallas_src>

<mosaic_0001>
module attributes {stable_mosaic.version = 11 : i64} {
  func.func @_in_lrelu_kernel(%arg0: i32, %arg1: memref<8x4096xf32, #tpu.memory_space<vmem>>, %arg2: memref<8x4096xf32, #tpu.memory_space<vmem>>) attributes {dimension_semantics = [#tpu.dimension_semantics<parallel>], iteration_bounds = array<i64: 1>, scalar_prefetch = 0 : i64, scratch_operands = 0 : i64, tpu.core_type = #tpu.core_type<tc>, window_params = [{transform_indices = @transform_0, window_bounds = array<i64: 8, 4096>}, {transform_indices = @transform_1, window_bounds = array<i64: 8, 4096>}]} {
    %c0 = arith.constant 0 : index
    %c0_0 = arith.constant 0 : index
    %0 = vector.load %arg1[%c0, %c0_0] : memref<8x4096xf32, #tpu.memory_space<vmem>>, vector<8x4096xf32>
    %cst = arith.constant dense<0.000000e+00> : vector<8xf32>
    %1 = vector.multi_reduction <add>, %0, %cst [1] : vector<8x4096xf32> to vector<8xf32>
    %2 = vector.shape_cast %1 : vector<8xf32> to vector<8x1xf32>
    %cst_1 = arith.constant 4.096000e+03 : f32
    %3 = vector.broadcast %cst_1 : f32 to vector<8x1xf32>
    %4 = arith.divf %2, %3 : vector<8x1xf32>
    %5 = vector.broadcast %4 : vector<8x1xf32> to vector<8x4096xf32>
    %6 = arith.subf %0, %5 : vector<8x4096xf32>
    %7 = arith.mulf %6, %6 : vector<8x4096xf32>
    %cst_2 = arith.constant dense<0.000000e+00> : vector<8xf32>
    %8 = vector.multi_reduction <add>, %7, %cst_2 [1] : vector<8x4096xf32> to vector<8xf32>
    %9 = vector.shape_cast %8 : vector<8xf32> to vector<8x1xf32>
    %cst_3 = arith.constant 4.096000e+03 : f32
    %10 = vector.broadcast %cst_3 : f32 to vector<8x1xf32>
    %11 = arith.divf %9, %10 : vector<8x1xf32>
    %cst_4 = arith.constant 9.99999974E-6 : f32
    %12 = vector.broadcast %cst_4 : f32 to vector<8x1xf32>
    %13 = arith.addf %11, %12 : vector<8x1xf32>
    %14 = math.rsqrt %13 : vector<8x1xf32>
    %15 = vector.broadcast %14 : vector<8x1xf32> to vector<8x4096xf32>
    %16 = arith.mulf %6, %15 : vector<8x4096xf32>
    %cst_5 = arith.constant 0.000000e+00 : f32
    %17 = vector.broadcast %cst_5 : f32 to vector<8x4096xf32>
    %18 = arith.cmpf oge, %16, %17 : vector<8x4096xf32>
    %cst_6 = arith.constant 0.00999999977 : f32
    %19 = vector.broadcast %cst_6 : f32 to vector<8x4096xf32>
    %20 = arith.mulf %19, %16 : vector<8x4096xf32>
    %21 = arith.select %18, %16, %20 : vector<8x4096xi1>, vector<8x4096xf32>
    %c0_7 = arith.constant 0 : index
    %c0_8 = arith.constant 0 : index
    %22 = vector.load %arg2[%c0_7, %c0_8] : memref<8x4096xf32, #tpu.memory_space<vmem>>, vector<8x4096xf32>
    tpu.vector_store %arg2[%c0_7, %c0_8], %21 {strides = array<i32>} : memref<8x4096xf32, #tpu.memory_space<vmem>>, vector<8x4096xf32>,
    return
  }
  func.func @transform_0(%arg0: i32) -> (i32, i32) {
    %c0_i32 = arith.constant 0 : i32
    %c0_i32_0 = arith.constant 0 : i32
    return %arg0, %c0_i32 : i32, i32
  }
  func.func @transform_1(%arg0: i32) -> (i32, i32) {
    %c0_i32 = arith.constant 0 : i32
    %c0_i32_0 = arith.constant 0 : i32
    return %arg0, %c0_i32 : i32, i32
  }
}

</mosaic_0001>

<llo_original>
// kernel: tpu_custom_call.1
$region0: #{tpu_custom_call.1}
  #allocation0 [shape = 'u32[]', space=smem, size = 0x4, offset = 0x4, fixed_abs, tag = 'smem constant byte address 0x4 - core index']
  #allocation1 [shape = 'u32[144,128]{1,0:T(1,128)}', space=vmem, size = 0x12000, scoped, tag = 'internal scratch']
  %s0 = inlined_call_operand.hbm [shape: f32[8,4096], index: 0, kind: input, shape index: {}]
  %s1 = inlined_call_operand.hbm [shape: f32[8,4096], index: 1, kind: output, shape index: {}]
  %s2 = sld [smem:[#allocation0]]
  $region18: #{tpu_custom_call.1} parent=0
    _
  %s4 = ssub.s32 1, %s2
  %s5 = scalar_select 0, %s4, %s2
  $region1: #{tpu_custom_call.1} parent=0
    #allocation2 [shape = 'u8[131072]{0}', space=vmem, size = 0x20000, scoped, tag = 'input window, operand 0, single buffered']
    #allocation3 [shape = 's32[1]{0}', space=sflag, size = 0x4, scoped, tag = 'scoped memory for tpu_custom_call.1']
    #allocation4 [shape = 's32[1]{0}', space=sflag, size = 0x4, scoped, tag = 'scoped memory for tpu_custom_call.1']
    #allocation5 [shape = 'u8[131072]{0}', space=vmem, size = 0x20000, scoped, tag = 'output window, operand 0, single buffered']
    %6 = vsyncpa [#allocation3], 0
    %7 = vsyncpa [#allocation4], 0
    // Predicated region
    $region2: #{tpu_custom_call.1} parent=1 // pred_check
      _
    $region3: #{tpu_custom_call.1} parent=1 // pred_check_branch
      %9 = sbr.rel (0) target = $region5
    $region4: #{tpu_custom_call.1} parent=1 // pred_region
      %s11 = ssub.s32 4096, 4096
      %12 = vsyncadd [#allocation3], %s11
      %s14 = sshll.u32 [#allocation2], 4
      %s15 = int_to_ptr.vmem [resolvable:$true] %s14
      %17 = dma.hbm_to_vmem [thread:$0]  %s0, 4096, %s15, [#allocation3]
    $region5: #{tpu_custom_call.1} parent=1 // pred_fallthru
      _
    // Predicated region
    $region6: #{tpu_custom_call.1} parent=1 // pred_check
      _
    $region7: #{tpu_custom_call.1} parent=1 // pred_check_branch
      %19 = sbr.rel (0) target = $region9
    $region8: #{tpu_custom_call.1} parent=1 // pred_region
      %20 = dma.done [#allocation3], 4096
    $region9: #{tpu_custom_call.1} parent=1 // pred_fallthru
      _
    %v21 = vld [vmem:[#allocation2] sm:$0xff]
    %v22 = vld [vmem:[#allocation2 + $0x8] sm:$0xff]
    %v23 = vld [vmem:[#allocation2 + $0x10] sm:$0xff]
    %v24 = vld [vmem:[#allocation2 + $0x18] sm:$0xff]
    %v25 = vld [vmem:[#allocation2 + $0x20] sm:$0xff]
    %v26 = vld [vmem:[#allocation2 + $0x28] sm:$0xff]
    %v27 = vld [vmem:[#allocation2 + $0x30] sm:$0xff]
    %v28 = vld [vmem:[#allocation2 + $0x38] sm:$0xff]
    %v29 = vld [vmem:[#allocation2 + $0x40] sm:$0xff]
    %v30 = vld [vmem:[#allocation2 + $0x48] sm:$0xff]
    %v31 = vld [vmem:[#allocation2 + $0x50] sm:$0xff]
    %v32 = vld [vmem:[#allocation2 + $0x58] sm:$0xff]
    %v33 = vld [vmem:[#allocation2 + $0x60] sm:$0xff]
    %v34 = vld [vmem:[#allocation2 + $0x68] sm:$0xff]
    %v35 = vld [vmem:[#allocation2 + $0x70] sm:$0xff]
    %v36 = vld [vmem:[#allocation2 + $0x78] sm:$0xff]
    %v37 = vld [vmem:[#allocation2 + $0x80] sm:$0xff]
    %v38 = vld [vmem:[#allocation2 + $0x88] sm:$0xff]
    %v39 = vld [vmem:[#allocation2 + $0x90] sm:$0xff]
    %v40 = vld [vmem:[#allocation2 + $0x98] sm:$0xff]
    %v41 = vld [vmem:[#allocation2 + $0xa0] sm:$0xff]
    %v42 = vld [vmem:[#allocation2 + $0xa8] sm:$0xff]
    %v43 = vld [vmem:[#allocation2 + $0xb0] sm:$0xff]
    %v44 = vld [vmem:[#allocation2 + $0xb8] sm:$0xff]
    %v45 = vld [vmem:[#allocation2 + $0xc0] sm:$0xff]
    %v46 = vld [vmem:[#allocation2 + $0xc8] sm:$0xff]
    %v47 = vld [vmem:[#allocation2 + $0xd0] sm:$0xff]
    %v48 = vld [vmem:[#allocation2 + $0xd8] sm:$0xff]
    %v49 = vld [vmem:[#allocation2 + $0xe0] sm:$0xff]
    %v50 = vld [vmem:[#allocation2 + $0xe8] sm:$0xff]
    %v51 = vld [vmem:[#allocation2 + $0xf0] sm:$0xff]
    %v52 = vld [vmem:[#allocation2 + $0xf8] sm:$0xff]
    %v53 = vadd.f32 %v21, %v22
    %v54 = vadd.f32 %v53, %v23
    %v55 = vadd.f32 %v54, %v24
    %v56 = vadd.f32 %v55, %v25
    %v57 = vadd.f32 %v56, %v26
    %v58 = vadd.f32 %v57, %v27
    %v59 = vadd.f32 %v58, %v28
    %v60 = vadd.f32 %v59, %v29
    %v61 = vadd.f32 %v60, %v30
    %v62 = vadd.f32 %v61, %v31
    %v63 = vadd.f32 %v62, %v32
    %v64 = vadd.f32 %v63, %v33
    %v65 = vadd.f32 %v64, %v34
    %v66 = vadd.f32 %v65, %v35
    %v67 = vadd.f32 %v66, %v36
    %v68 = vadd.f32 %v67, %v37
    %v69 = vadd.f32 %v68, %v38
    %v70 = vadd.f32 %v69, %v39
    %v71 = vadd.f32 %v70, %v40
    %v72 = vadd.f32 %v71, %v41
    %v73 = vadd.f32 %v72, %v42
    %v74 = vadd.f32 %v73, %v43
    %v75 = vadd.f32 %v74, %v44
    %v76 = vadd.f32 %v75, %v45
    %v77 = vadd.f32 %v76, %v46
    %v78 = vadd.f32 %v77, %v47
    %v79 = vadd.f32 %v78, %v48
    %v80 = vadd.f32 %v79, %v49
    %v81 = vadd.f32 %v80, %v50
    %v82 = vadd.f32 %v81, %v51
    %v83 = vadd.f32 %v82, %v52
    %84 = vadd.xlane.f32.xlu0 %v83
    %v85 = vpop.xlane.xlu0 %84
    %v86 = vrcp.pop 4096.0
    %v87 = vmul.f32 %v85, %v86
    %v88 = vsub.f32 %v21, %v87
    %v89 = vsub.f32 %v22, %v87
    %v90 = vsub.f32 %v23, %v87
    %v91 = vsub.f32 %v24, %v87
    %v92 = vsub.f32 %v25, %v87
    %v93 = vsub.f32 %v26, %v87
    %v94 = vsub.f32 %v27, %v87
    %v95 = vsub.f32 %v28, %v87
    %v96 = vsub.f32 %v29, %v87
    %v97 = vsub.f32 %v30, %v87
    %v98 = vsub.f32 %v31, %v87
    %v99 = vsub.f32 %v32, %v87
    %v100 = vsub.f32 %v33, %v87
    %v101 = vsub.f32 %v34, %v87
    %v102 = vsub.f32 %v35, %v87
    %v103 = vsub.f32 %v36, %v87
    %v104 = vsub.f32 %v37, %v87
    %v105 = vsub.f32 %v38, %v87
    %v106 = vsub.f32 %v39, %v87
    %v107 = vsub.f32 %v40, %v87
    %v108 = vsub.f32 %v41, %v87
    %v109 = vsub.f32 %v42, %v87
    %v110 = vsub.f32 %v43, %v87
    %v111 = vsub.f32 %v44, %v87
    %v112 = vsub.f32 %v45, %v87
    %v113 = vsub.f32 %v46, %v87
    %v114 = vsub.f32 %v47, %v87
    %v115 = vsub.f32 %v48, %v87
    %v116 = vsub.f32 %v49, %v87
    %v117 = vsub.f32 %v50, %v87
    %v118 = vsub.f32 %v51, %v87
    %v119 = vsub.f32 %v52, %v87
    %v120 = vmul.f32 %v88, %v88
    %v121 = vmul.f32 %v89, %v89
    %v122 = vmul.f32 %v90, %v90
    %v123 = vmul.f32 %v91, %v91
    %v124 = vmul.f32 %v92, %v92
    %v125 = vmul.f32 %v93, %v93
    %v126 = vmul.f32 %v94, %v94
    %v127 = vmul.f32 %v95, %v95
    %v128 = vmul.f32 %v96, %v96
    %v129 = vmul.f32 %v97, %v97
    %v130 = vmul.f32 %v98, %v98
    %v131 = vmul.f32 %v99, %v99
    %v132 = vmul.f32 %v100, %v100
    %v133 = vmul.f32 %v101, %v101
    %v134 = vmul.f32 %v102, %v102
    %v135 = vmul.f32 %v103, %v103
    %v136 = vmul.f32 %v104, %v104
    %v137 = vmul.f32 %v105, %v105
    %v138 = vmul.f32 %v106, %v106
    %v139 = vmul.f32 %v107, %v107
    %v140 = vmul.f32 %v108, %v108
    %v141 = vmul.f32 %v109, %v109
    %v142 = vmul.f32 %v110, %v110
    %v143 = vmul.f32 %v111, %v111
    %v144 = vmul.f32 %v112, %v112
    %v145 = vmul.f32 %v113, %v113
    %v146 = vmul.f32 %v114, %v114
    %v147 = vmul.f32 %v115, %v115
    %v148 = vmul.f32 %v116, %v116
    %v149 = vmul.f32 %v117, %v117
    %v150 = vmul.f32 %v118, %v118
    %v151 = vmul.f32 %v119, %v119
    %v152 = vadd.f32 %v120, %v121
    %v153 = vadd.f32 %v152, %v122
    %v154 = vadd.f32 %v153, %v123
    %v155 = vadd.f32 %v154, %v124
    %v156 = vadd.f32 %v155, %v125
    %v157 = vadd.f32 %v156, %v126
    %v158 = vadd.f32 %v157, %v127
    %v159 = vadd.f32 %v158, %v128
    %v160 = vadd.f32 %v159, %v129
    %v161 = vadd.f32 %v160, %v130
    %v162 = vadd.f32 %v161, %v131
    %v163 = vadd.f32 %v162, %v132
    %v164 = vadd.f32 %v163, %v133
    %v165 = vadd.f32 %v164, %v134
    %v166 = vadd.f32 %v165, %v135
    %v167 = vadd.f32 %v166, %v136
    %v168 = vadd.f32 %v167, %v137
    %v169 = vadd.f32 %v168, %v138
    %v170 = vadd.f32 %v169, %v139
    %v171 = vadd.f32 %v170, %v140
    %v172 = vadd.f32 %v171, %v141
    %v173 = vadd.f32 %v172, %v142
    %v174 = vadd.f32 %v173, %v143
    %v175 = vadd.f32 %v174, %v144
    %v176 = vadd.f32 %v175, %v145
    %v177 = vadd.f32 %v176, %v146
    %v178 = vadd.f32 %v177, %v147
    %v179 = vadd.f32 %v178, %v148
    %v180 = vadd.f32 %v179, %v149
    %v181 = vadd.f32 %v180, %v150
    %v182 = vadd.f32 %v181, %v151
    %183 = vadd.xlane.f32.xlu0 %v182
    %v184 = vpop.xlane.xlu0 %183
    %v185 = vmul.f32 %v184, %v86
    %v186 = vadd.f32 %v185, 1e-05
    %v187 = vrsqrt.pop %v186
    %v188 = vmul.f32 %v88, %v187
    %v189 = vmul.f32 %v89, %v187
    %v190 = vmul.f32 %v90, %v187
    %v191 = vmul.f32 %v91, %v187
    %v192 = vmul.f32 %v92, %v187
    %v193 = vmul.f32 %v93, %v187
    %v194 = vmul.f32 %v94, %v187
    %v195 = vmul.f32 %v95, %v187
    %v196 = vmul.f32 %v96, %v187
    %v197 = vmul.f32 %v97, %v187
    %v198 = vmul.f32 %v98, %v187
    %v199 = vmul.f32 %v99, %v187
    %v200 = vmul.f32 %v100, %v187
    %v201 = vmul.f32 %v101, %v187
    %v202 = vmul.f32 %v102, %v187
    %v203 = vmul.f32 %v103, %v187
    %v204 = vmul.f32 %v104, %v187
    %v205 = vmul.f32 %v105, %v187
    %v206 = vmul.f32 %v106, %v187
    %v207 = vmul.f32 %v107, %v187
    %v208 = vmul.f32 %v108, %v187
    %v209 = vmul.f32 %v109, %v187
    %v210 = vmul.f32 %v110, %v187
    %v211 = vmul.f32 %v111, %v187
    %v212 = vmul.f32 %v112, %v187
    %v213 = vmul.f32 %v113, %v187
    %v214 = vmul.f32 %v114, %v187
    %v215 = vmul.f32 %v115, %v187
    %v216 = vmul.f32 %v116, %v187
    %v217 = vmul.f32 %v117, %v187
    %v218 = vmul.f32 %v118, %v187
    %v219 = vmul.f32 %v119, %v187
    %vm220 = vcmp.ge.f32.partialorder %v188, 0.0
    %vm221 = vcmp.ge.f32.partialorder %v189, 0.0
    %vm222 = vcmp.ge.f32.partialorder %v190, 0.0
    %vm223 = vcmp.ge.f32.partialorder %v191, 0.0
    %vm224 = vcmp.ge.f32.partialorder %v192, 0.0
    %vm225 = vcmp.ge.f32.partialorder %v193, 0.0
    %vm226 = vcmp.ge.f32.partialorder %v194, 0.0
    %vm227 = vcmp.ge.f32.partialorder %v195, 0.0
    %vm228 = vcmp.ge.f32.partialorder %v196, 0.0
    %vm229 = vcmp.ge.f32.partialorder %v197, 0.0
    %vm230 = vcmp.ge.f32.partialorder %v198, 0.0
    %vm231 = vcmp.ge.f32.partialorder %v199, 0.0
    %vm232 = vcmp.ge.f32.partialorder %v200, 0.0
    %vm233 = vcmp.ge.f32.partialorder %v201, 0.0
    %vm234 = vcmp.ge.f32.partialorder %v202, 0.0
    %vm235 = vcmp.ge.f32.partialorder %v203, 0.0
    %vm236 = vcmp.ge.f32.partialorder %v204, 0.0
    %vm237 = vcmp.ge.f32.partialorder %v205, 0.0
    %vm238 = vcmp.ge.f32.partialorder %v206, 0.0
    %vm239 = vcmp.ge.f32.partialorder %v207, 0.0
    %vm240 = vcmp.ge.f32.partialorder %v208, 0.0
    %vm241 = vcmp.ge.f32.partialorder %v209, 0.0
    %vm242 = vcmp.ge.f32.partialorder %v210, 0.0
    %vm243 = vcmp.ge.f32.partialorder %v211, 0.0
    %vm244 = vcmp.ge.f32.partialorder %v212, 0.0
    %vm245 = vcmp.ge.f32.partialorder %v213, 0.0
    %vm246 = vcmp.ge.f32.partialorder %v214, 0.0
    %vm247 = vcmp.ge.f32.partialorder %v215, 0.0
    %vm248 = vcmp.ge.f32.partialorder %v216, 0.0
    %vm249 = vcmp.ge.f32.partialorder %v217, 0.0
    %vm250 = vcmp.ge.f32.partialorder %v218, 0.0
    %vm251 = vcmp.ge.f32.partialorder %v219, 0.0
    %v252 = vmul.f32 %v188, 0.01
    %v253 = vmul.f32 %v189, 0.01
    %v254 = vmul.f32 %v190, 0.01
    %v255 = vmul.f32 %v191, 0.01
    %v256 = vmul.f32 %v192, 0.01
    %v257 = vmul.f32 %v193, 0.01
    %v258 = vmul.f32 %v194, 0.01
    %v259 = vmul.f32 %v195, 0.01
    %v260 = vmul.f32 %v196, 0.01
    %v261 = vmul.f32 %v197, 0.01
    %v262 = vmul.f32 %v198, 0.01
    %v263 = vmul.f32 %v199, 0.01
    %v264 = vmul.f32 %v200, 0.01
    %v265 = vmul.f32 %v201, 0.01
    %v266 = vmul.f32 %v202, 0.01
    %v267 = vmul.f32 %v203, 0.01
    %v268 = vmul.f32 %v204, 0.01
    %v269 = vmul.f32 %v205, 0.01
    %v270 = vmul.f32 %v206, 0.01
    %v271 = vmul.f32 %v207, 0.01
    %v272 = vmul.f32 %v208, 0.01
    %v273 = vmul.f32 %v209, 0.01
    %v274 = vmul.f32 %v210, 0.01
    %v275 = vmul.f32 %v211, 0.01
    %v276 = vmul.f32 %v212, 0.01
    %v277 = vmul.f32 %v213, 0.01
    %v278 = vmul.f32 %v214, 0.01
    %v279 = vmul.f32 %v215, 0.01
    %v280 = vmul.f32 %v216, 0.01
    %v281 = vmul.f32 %v217, 0.01
    %v282 = vmul.f32 %v218, 0.01
    %v283 = vmul.f32 %v219, 0.01
    %v284 = vsel %vm220, %v188, %v252
    %v285 = vsel %vm221, %v189, %v253
    %v286 = vsel %vm222, %v190, %v254
    %v287 = vsel %vm223, %v191, %v255
    %v288 = vsel %vm224, %v192, %v256
    %v289 = vsel %vm225, %v193, %v257
    %v290 = vsel %vm226, %v194, %v258
    %v291 = vsel %vm227, %v195, %v259
    %v292 = vsel %vm228, %v196, %v260
    %v293 = vsel %vm229, %v197, %v261
    %v294 = vsel %vm230, %v198, %v262
    %v295 = vsel %vm231, %v199, %v263
    %v296 = vsel %vm232, %v200, %v264
    %v297 = vsel %vm233, %v201, %v265
    %v298 = vsel %vm234, %v202, %v266
    %v299 = vsel %vm235, %v203, %v267
    %v300 = vsel %vm236, %v204, %v268
    %v301 = vsel %vm237, %v205, %v269
    %v302 = vsel %vm238, %v206, %v270
    %v303 = vsel %vm239, %v207, %v271
    %v304 = vsel %vm240, %v208, %v272
    %v305 = vsel %vm241, %v209, %v273
    %v306 = vsel %vm242, %v210, %v274
    %v307 = vsel %vm243, %v211, %v275
    %v308 = vsel %vm244, %v212, %v276
    %v309 = vsel %vm245, %v213, %v277
    %v310 = vsel %vm246, %v214, %v278
    %v311 = vsel %vm247, %v215, %v279
    %v312 = vsel %vm248, %v216, %v280
    %v313 = vsel %vm249, %v217, %v281
    %v314 = vsel %vm250, %v218, %v282
    %v315 = vsel %vm251, %v219, %v283
    %316 = vst [vmem:[#allocation5] sm:$0xff] %v284
    %317 = vst [vmem:[#allocation5 + $0x8] sm:$0xff] %v285
    %318 = vst [vmem:[#allocation5 + $0x10] sm:$0xff] %v286
    %319 = vst [vmem:[#allocation5 + $0x18] sm:$0xff] %v287
    %320 = vst [vmem:[#allocation5 + $0x20] sm:$0xff] %v288
    %321 = vst [vmem:[#allocation5 + $0x28] sm:$0xff] %v289
    %322 = vst [vmem:[#allocation5 + $0x30] sm:$0xff] %v290
    %323 = vst [vmem:[#allocation5 + $0x38] sm:$0xff] %v291
    %324 = vst [vmem:[#allocation5 + $0x40] sm:$0xff] %v292
    %325 = vst [vmem:[#allocation5 + $0x48] sm:$0xff] %v293
    %326 = vst [vmem:[#allocation5 + $0x50] sm:$0xff] %v294
    %327 = vst [vmem:[#allocation5 + $0x58] sm:$0xff] %v295
    %328 = vst [vmem:[#allocation5 + $0x60] sm:$0xff] %v296
    %329 = vst [vmem:[#allocation5 + $0x68] sm:$0xff] %v297
    %330 = vst [vmem:[#allocation5 + $0x70] sm:$0xff] %v298
    %331 = vst [vmem:[#allocation5 + $0x78] sm:$0xff] %v299
    %332 = vst [vmem:[#allocation5 + $0x80] sm:$0xff] %v300
    %333 = vst [vmem:[#allocation5 + $0x88] sm:$0xff] %v301
    %334 = vst [vmem:[#allocation5 + $0x90] sm:$0xff] %v302
    %335 = vst [vmem:[#allocation5 + $0x98] sm:$0xff] %v303
    %336 = vst [vmem:[#allocation5 + $0xa0] sm:$0xff] %v304
    %337 = vst [vmem:[#allocation5 + $0xa8] sm:$0xff] %v305
    %338 = vst [vmem:[#allocation5 + $0xb0] sm:$0xff] %v306
    %339 = vst [vmem:[#allocation5 + $0xb8] sm:$0xff] %v307
    %340 = vst [vmem:[#allocation5 + $0xc0] sm:$0xff] %v308
    %341 = vst [vmem:[#allocation5 + $0xc8] sm:$0xff] %v309
    %342 = vst [vmem:[#allocation5 + $0xd0] sm:$0xff] %v310
    %343 = vst [vmem:[#allocation5 + $0xd8] sm:$0xff] %v311
    %344 = vst [vmem:[#allocation5 + $0xe0] sm:$0xff] %v312
    %345 = vst [vmem:[#allocation5 + $0xe8] sm:$0xff] %v313
    %346 = vst [vmem:[#allocation5 + $0xf0] sm:$0xff] %v314
    %347 = vst [vmem:[#allocation5 + $0xf8] sm:$0xff] %v315
    // Predicated region
    $region10: #{tpu_custom_call.1} parent=1 // pred_check
      _
    $region11: #{tpu_custom_call.1} parent=1 // pred_check_branch
      %349 = sbr.rel (0) target = $region13
    $region12: #{tpu_custom_call.1} parent=1 // pred_region
      %s351 = ssub.s32 4096, 4096
      %352 = vsyncadd [#allocation4], %s351
      %s354 = sshll.u32 [#allocation5], 4
      %s355 = int_to_ptr.vmem [resolvable:$true] %s354
      %357 = dma.vmem_to_hbm [thread:$0]  %s355, 4096, %s1, [#allocation4]
    $region13: #{tpu_custom_call.1} parent=1 // pred_fallthru
      _
    // Predicated region
    $region14: #{tpu_custom_call.1} parent=1 // pred_check
      _
    $region15: #{tpu_custom_call.1} parent=1 // pred_check_branch
      %359 = sbr.rel (0) target = $region17
    $region16: #{tpu_custom_call.1} parent=1 // pred_region
      %360 = dma.done [#allocation4], 4096
    $region17: #{tpu_custom_call.1} parent=1 // pred_fallthru
      _
    %361 = vsyncpa [#allocation3], 1
    %362 = vsyncpa [#allocation4], 1

</llo_original>
